<compile_context>
chip_gen: v5e
topology: v5e:2x2
jax: 0.10.0
libtpu: 0.0.40
codegen_flags: <defaults>
</compile_context>

<pallas_src>
import functools

import jax
import jax.numpy as jnp
from jax.experimental import pallas as pl
from jax.experimental.pallas import tpu as pltpu

EPS = 1e-5
_CHUNK_ROWS = 512          # row-chunk for in-kernel accumulation (fused path)


def _cdiv(a, b):
    return (a + b - 1) // b


def _round_up(x, m):
    return (x + m - 1) // m * m


def _vmem_budget():
    """Per-grid-step VMEM budget and scoped limit from the real chip."""
    cap = None
    try:
        cap = getattr(pltpu.get_tpu_info(), "vmem_capacity_bytes", None)
    except Exception:
        cap = None
    if not cap:
        cap = 64 * 1024 * 1024        # conservative fallback (v7x per-TC VMEM)
    limit = min(int(cap * 0.75), 100 * 1024 * 1024)
    budget = min(int(cap * 0.50), 80 * 1024 * 1024, limit - 4 * 1024 * 1024)
    return budget, limit


# ---------------------------------------------------------------------------
# Fused single-kernel path: each grid step normalizes an (N, TILE_H) column
# block; per-channel stats are computed over all N rows inside the block with
# chunked f32 VPU reductions (single HBM read + single HBM write overall).
# ---------------------------------------------------------------------------
def _bn_fused_kernel(x_ref, gamma_ref, beta_ref, o_ref, *, inv_n, chunk):
    n, th = x_ref.shape
    num_chunks = n // chunk
    n_full = num_chunks * chunk
    rem = n - n_full

    def _load(c):
        lo = pl.multiple_of(c * chunk, chunk)
        return x_ref[pl.ds(lo, chunk), :].astype(jnp.float32)

    # ---- pass 1: per-channel sum -> mean (VPU column sums, f32) ----
    s1 = jnp.zeros((1, th), jnp.float32)
    if num_chunks > 0:
        s1 = jax.lax.fori_loop(
            0, num_chunks,
            lambda c, acc: acc + jnp.sum(_load(c), axis=0, keepdims=True),
            s1)
    if rem > 0:
        s1 = s1 + jnp.sum(x_ref[n_full:, :].astype(jnp.float32),
                          axis=0, keepdims=True)
    mean = s1 * inv_n

    # ---- pass 2: centered sum of squares -> biased variance ----
    def _var_body(c, acc):
        d = _load(c) - mean
        return acc + jnp.sum(d * d, axis=0, keepdims=True)

    s2 = jnp.zeros((1, th), jnp.float32)
    if num_chunks > 0:
        s2 = jax.lax.fori_loop(0, num_chunks, _var_body, s2)
    if rem > 0:
        d = x_ref[n_full:, :].astype(jnp.float32) - mean
        s2 = s2 + jnp.sum(d * d, axis=0, keepdims=True)
    var = s2 * inv_n

    # Fold affine into one per-channel scale/shift -> 2 VPU ops per element.
    scale = jax.lax.rsqrt(var + EPS) * gamma_ref[...]
    shift = beta_ref[...] - mean * scale

    # ---- pass 3: apply ----
    def _apply_body(c, carry):
        lo = pl.multiple_of(c * chunk, chunk)
        xc = x_ref[pl.ds(lo, chunk), :].astype(jnp.float32)
        o_ref[pl.ds(lo, chunk), :] = (xc * scale + shift).astype(o_ref.dtype)
        return carry

    if num_chunks > 0:
        jax.lax.fori_loop(0, num_chunks, _apply_body, 0)
    if rem > 0:
        xr = x_ref[n_full:, :].astype(jnp.float32)
        o_ref[n_full:, :] = (xr * scale + shift).astype(o_ref.dtype)


def _fused_footprint(n_rows, tile_h, itemsize):
    io = n_rows * tile_h * itemsize * 4                # in + out, double-buffered
    temps = min(_CHUNK_ROWS, n_rows) * tile_h * 4 * 3  # chunked f32 temporaries
    vecs = tile_h * 4 * 8                              # mean/var/scale/shift/...
    return io + temps + vecs


def _select_tile_h(H, n_rows, itemsize, budget):
    """Channel tile for the fused path, or None if it cannot fit VMEM."""
    def fits(th):
        return _fused_footprint(n_rows, th, itemsize) <= budget

    if H <= 256:
        return H if fits(H) else None
    # Prefer >=4 grid steps (v7x megacore + deep pipelining), then >=2 steps
    # (double-buffer overlap); keep tiles >=256 lanes for DMA efficiency.
    for min_steps in (4, 2):
        for th in (512, 384, 256):
            if _cdiv(H, th) >= min_steps and fits(th):
                return th
    if fits(128):          # last resort before the 1.5x-traffic two-pass path
        return 128
    return None


def _bn_fused(x2d, gamma2d, beta2d, tile_h, vmem_limit):
    N, H = x2d.shape
    itemsize = jnp.dtype(x2d.dtype).itemsize
    kernel = functools.partial(_bn_fused_kernel, inv_n=1.0 / N, chunk=_CHUNK_ROWS)
    return pl.pallas_call(
        kernel,
        out_shape=jax.ShapeDtypeStruct((N, H), x2d.dtype),
        grid=(_cdiv(H, tile_h),),
        in_specs=[
            pl.BlockSpec((N, tile_h), lambda j: (0, j)),
            pl.BlockSpec((1, tile_h), lambda j: (0, j)),
            pl.BlockSpec((1, tile_h), lambda j: (0, j)),
        ],
        out_specs=pl.BlockSpec((N, tile_h), lambda j: (0, j)),
        compiler_params=pltpu.CompilerParams(
            dimension_semantics=("parallel",),
            vmem_limit_bytes=int(vmem_limit),
        ),
        cost_estimate=pl.CostEstimate(
            flops=int(8 * N * H),
            transcendentals=int(H),
            bytes_accessed=int(2 * N * H * itemsize + 12 * H),
        ),
    )(x2d, gamma2d, beta2d)


# ---------------------------------------------------------------------------
# Two-pass fallback (very large N): stats kernel accumulates per-channel
# sum / sumsq over row tiles in VMEM scratch (rows of a ragged last tile are
# masked in-kernel), then an apply kernel does the tiled scale/shift.
# NOTE: uses E[x^2] - E[x]^2 (one HBM read for stats); slightly less robust
# than the fused path's centered variance when |mean| >> std.
# ---------------------------------------------------------------------------
def _bn_stats_kernel(x_ref, s1_ref, s2_ref, s1_acc, s2_acc, *, n_rows, tile_n):
    ni = pl.program_id(1)

    @pl.when(ni == 0)
    def _():
        s1_acc[...] = jnp.zeros_like(s1_acc)
        s2_acc[...] = jnp.zeros_like(s2_acc)

    xf = x_ref[...].astype(jnp.float32)
    if n_rows % tile_n != 0:
        # Ragged last row tile: OOB block reads are unspecified, mask them out.
        row = jax.lax.broadcasted_iota(jnp.int32, (x_ref.shape[0], 1), 0)
        xf = jnp.where(ni * tile_n + row < n_rows, xf, 0.0)
    s1_acc[...] += jnp.sum(xf, axis=0, keepdims=True)
    s2_acc[...] += jnp.sum(xf * xf, axis=0, keepdims=True)

    @pl.when(ni == pl.num_programs(1) - 1)
    def _():
        s1_ref[...] = s1_acc[...]
        s2_ref[...] = s2_acc[...]


def _bn_apply_kernel(x_ref, scale_ref, shift_ref, o_ref):
    xf = x_ref[...].astype(jnp.float32)
    o_ref[...] = (xf * scale_ref[...] + shift_ref[...]).astype(o_ref.dtype)


def _bn_two_pass(x2d, gamma2d, beta2d, budget, vmem_limit):
    N, H = x2d.shape
    dt = x2d.dtype
    itemsize = jnp.dtype(dt).itemsize
    per_elem = itemsize * 4 + 12     # double-buffered in/out + f32 temporaries

    # Prefer full-width row slabs: fully contiguous DMAs, lane-dense stores.
    if 8 * H * per_elem <= budget:
        tile_h = H
    else:
        tile_h = 512 if (H >= 512 and 8 * 512 * per_elem <= budget) else 256
    tile_n = budget // (tile_h * per_elem)
    tile_n = min(tile_n, 4096, max(8, (N // 8) * 8))
    tile_n = max(8, (tile_n // 8) * 8)

    grid = (_cdiv(H, tile_h), _cdiv(N, tile_n))

    stats_kernel = functools.partial(_bn_stats_kernel, n_rows=N, tile_n=tile_n)
    s1, s2 = pl.pallas_call(
        stats_kernel,
        out_shape=(
            jax.ShapeDtypeStruct((1, H), jnp.float32),
            jax.ShapeDtypeStruct((1, H), jnp.float32),
        ),
        grid=grid,
        in_specs=[pl.BlockSpec((tile_n, tile_h), lambda hi, ni: (ni, hi))],
        out_specs=[
            pl.BlockSpec((1, tile_h), lambda hi, ni: (0, hi)),
            pl.BlockSpec((1, tile_h), lambda hi, ni: (0, hi)),
        ],
        scratch_shapes=[
            pltpu.VMEM((1, tile_h), jnp.float32),
            pltpu.VMEM((1, tile_h), jnp.float32),
        ],
        compiler_params=pltpu.CompilerParams(
            dimension_semantics=("parallel", "arbitrary"),
            vmem_limit_bytes=int(vmem_limit),
        ),
        cost_estimate=pl.CostEstimate(
            flops=int(3 * N * H),
            transcendentals=0,
            bytes_accessed=int(N * H * itemsize + 8 * H),
        ),
    )(x2d)

    inv_n = jnp.float32(1.0 / N)
    mean = s1 * inv_n
    var = jnp.maximum(s2 * inv_n - mean * mean, 0.0)     # biased variance
    scale = jax.lax.rsqrt(var + EPS) * gamma2d
    shift = beta2d - mean * scale

    out2d = pl.pallas_call(
        _bn_apply_kernel,
        out_shape=jax.ShapeDtypeStruct((N, H), dt),
        grid=grid,
        in_specs=[
            pl.BlockSpec((tile_n, tile_h), lambda hi, ni: (ni, hi)),
            pl.BlockSpec((1, tile_h), lambda hi, ni: (0, hi)),
            pl.BlockSpec((1, tile_h), lambda hi, ni: (0, hi)),
        ],
        out_specs=pl.BlockSpec((tile_n, tile_h), lambda hi, ni: (ni, hi)),
        compiler_params=pltpu.CompilerParams(
            dimension_semantics=("parallel", "parallel"),
            vmem_limit_bytes=int(vmem_limit),
        ),
        cost_estimate=pl.CostEstimate(
            flops=int(2 * N * H),
            transcendentals=0,
            bytes_accessed=int(2 * N * H * itemsize + 8 * H),
        ),
    )(x2d, scale, shift)
    return out2d


# ---------------------------------------------------------------------------
# Wrapper
# ---------------------------------------------------------------------------
@functools.partial(jax.jit, static_argnames=("force_two_pass",))
def batch_norm_overtime(x, gamma, beta, *, force_two_pass=False):
    """x: (seq_len, batch, hidden); gamma, beta: (hidden,)."""
    T, B, H = x.shape
    N = T * B
    itemsize = jnp.dtype(x.dtype).itemsize

    # Collapsing contiguous leading dims is a bitcast — no HBM round trip.
    x2d = x.reshape(N, H)
    gamma2d = gamma.reshape(1, H).astype(jnp.float32)
    beta2d = beta.reshape(1, H).astype(jnp.float32)

    budget, vmem_limit = _vmem_budget()

    tile_h = None if force_two_pass else _select_tile_h(H, N, itemsize, budget)
    if tile_h is not None:
        out2d = _bn_fused(x2d, gamma2d, beta2d, tile_h, vmem_limit)
    else:
        out2d = _bn_two_pass(x2d, gamma2d, beta2d, budget, vmem_limit)

    return out2d.reshape(T, B, H)


def _reference(x, gamma, beta):
    # pure-JAX reference mirroring PyTorch BatchNorm1d (training mode)
    xf = x.astype(jnp.float32)
    mean = jnp.mean(xf, axis=(0, 1), keepdims=True)
    var = jnp.mean((xf - mean) ** 2, axis=(0, 1), keepdims=True)
    return ((xf - mean) / jnp.sqrt(var + EPS) * gamma + beta).astype(x.dtype)


if __name__ == "__main__":
    key = jax.random.PRNGKey(0)

    # Main case (matches the module's typical small shapes).
    seq_len, batch, hidden = 8, 2, 32
    x = jax.random.normal(key, (seq_len, batch, hidden), dtype=jnp.float32)
    gamma = jnp.ones((hidden,), dtype=jnp.float32)
    beta = jnp.zeros((hidden,), dtype=jnp.float32)
    ref = _reference(x, gamma, beta)

    out = batch_norm_overtime(x, gamma, beta)
    jax.block_until_ready(out)
    assert out.shape == (seq_len, batch, hidden)
    assert jnp.allclose(out, ref, atol=1e-5, rtol=1e-5)

    # Exercise the two-pass (stats + apply) fallback used for very large T*B.
    out2 = batch_norm_overtime(x, gamma, beta, force_two_pass=True)
    jax.block_until_ready(out2)
    assert jnp.allclose(out2, ref, atol=1e-5, rtol=1e-5)

    # Ragged channel count (H not a multiple of 128 -> partial lane tile).
    xb = jax.random.normal(jax.random.PRNGKey(1), (8, 4, 300), dtype=jnp.float32)
    gb = jnp.ones((300,), jnp.float32)
    bb = jnp.zeros((300,), jnp.float32)
    outb = batch_norm_overtime(xb, gb, bb)
    jax.block_until_ready(outb)
    assert jnp.allclose(outb, _reference(xb, gb, bb), atol=1e-5, rtol=1e-5)

    # Ragged row count on the two-pass path (masked partial row tile).
    xc = jax.random.normal(jax.random.PRNGKey(2), (7, 3, 96), dtype=jnp.float32)
    gc = jnp.ones((96,), jnp.float32)
    bc = jnp.zeros((96,), jnp.float32)
    outc = batch_norm_overtime(xc, gc, bc, force_two_pass=True)
    jax.block_until_ready(outc)
    assert jnp.allclose(outc, _reference(xc, gc, bc), atol=1e-5, rtol=1e-5)

    # TODO(synk): running_mean/running_var buffer updates (training-time side
    # effect of nn.BatchNorm1d) are not modeled; forward output does not need them.
    print("KERNEL_OK")
</pallas_src>

<mosaic_0001>
module attributes {stable_mosaic.version = 11 : i64} {
  func.func @_bn_fused_kernel(%arg0: i32, %arg1: memref<16x32xf32, #tpu.memory_space<vmem>>, %arg2: memref<1x32xf32, #tpu.memory_space<vmem>>, %arg3: memref<1x32xf32, #tpu.memory_space<vmem>>, %arg4: memref<16x32xf32, #tpu.memory_space<vmem>>) attributes {dimension_semantics = [#tpu.dimension_semantics<parallel>], iteration_bounds = array<i64: 1>, scalar_prefetch = 0 : i64, scratch_operands = 0 : i64, tpu.core_type = #tpu.core_type<tc>, window_params = [{transform_indices = @transform_0, window_bounds = array<i64: 16, 32>}, {transform_indices = @transform_1, window_bounds = array<i64: 1, 32>}, {transform_indices = @transform_2, window_bounds = array<i64: 1, 32>}, {transform_indices = @transform_3, window_bounds = array<i64: 16, 32>}]} {
    %cst = arith.constant 0.000000e+00 : f32
    %0 = vector.broadcast %cst : f32 to vector<1x32xf32>
    %c0 = arith.constant 0 : index
    %c0_0 = arith.constant 0 : index
    %1 = vector.load %arg1[%c0, %c0_0] : memref<16x32xf32, #tpu.memory_space<vmem>>, vector<16x32xf32>
    %cst_1 = arith.constant dense<0.000000e+00> : vector<32xf32>
    %2 = vector.multi_reduction <add>, %1, %cst_1 [0] : vector<16x32xf32> to vector<32xf32>
    %3 = vector.shape_cast %2 : vector<32xf32> to vector<1x32xf32>
    %4 = arith.addf %0, %3 : vector<1x32xf32>
    %cst_2 = arith.constant 6.250000e-02 : f32
    %5 = vector.broadcast %cst_2 : f32 to vector<1x32xf32>
    %6 = arith.mulf %4, %5 : vector<1x32xf32>
    %cst_3 = arith.constant 0.000000e+00 : f32
    %7 = vector.broadcast %cst_3 : f32 to vector<1x32xf32>
    %c0_4 = arith.constant 0 : index
    %c0_5 = arith.constant 0 : index
    %8 = vector.load %arg1[%c0_4, %c0_5] : memref<16x32xf32, #tpu.memory_space<vmem>>, vector<16x32xf32>
    %9 = vector.broadcast %6 : vector<1x32xf32> to vector<16x32xf32>
    %10 = arith.subf %8, %9 : vector<16x32xf32>
    %11 = arith.mulf %10, %10 : vector<16x32xf32>
    %cst_6 = arith.constant dense<0.000000e+00> : vector<32xf32>
    %12 = vector.multi_reduction <add>, %11, %cst_6 [0] : vector<16x32xf32> to vector<32xf32>
    %13 = vector.shape_cast %12 : vector<32xf32> to vector<1x32xf32>
    %14 = arith.addf %7, %13 : vector<1x32xf32>
    %cst_7 = arith.constant 6.250000e-02 : f32
    %15 = vector.broadcast %cst_7 : f32 to vector<1x32xf32>
    %16 = arith.mulf %14, %15 : vector<1x32xf32>
    %cst_8 = arith.constant 9.99999974E-6 : f32
    %17 = vector.broadcast %cst_8 : f32 to vector<1x32xf32>
    %18 = arith.addf %16, %17 : vector<1x32xf32>
    %19 = math.rsqrt %18 : vector<1x32xf32>
    %c0_9 = arith.constant 0 : index
    %c0_10 = arith.constant 0 : index
    %20 = vector.load %arg2[%c0_9, %c0_10] : memref<1x32xf32, #tpu.memory_space<vmem>>, vector<1x32xf32>
    %21 = arith.mulf %19, %20 : vector<1x32xf32>
    %c0_11 = arith.constant 0 : index
    %c0_12 = arith.constant 0 : index
    %22 = vector.load %arg3[%c0_11, %c0_12] : memref<1x32xf32, #tpu.memory_space<vmem>>, vector<1x32xf32>
    %23 = arith.mulf %6, %21 : vector<1x32xf32>
    %24 = arith.subf %22, %23 : vector<1x32xf32>
    %c0_13 = arith.constant 0 : index
    %c0_14 = arith.constant 0 : index
    %25 = vector.load %arg1[%c0_13, %c0_14] : memref<16x32xf32, #tpu.memory_space<vmem>>, vector<16x32xf32>
    %26 = vector.broadcast %21 : vector<1x32xf32> to vector<16x32xf32>
    %27 = arith.mulf %25, %26 : vector<16x32xf32>
    %28 = vector.broadcast %24 : vector<1x32xf32> to vector<16x32xf32>
    %29 = arith.addf %27, %28 : vector<16x32xf32>
    %c0_15 = arith.constant 0 : index
    %c0_16 = arith.constant 0 : index
    %30 = vector.load %arg4[%c0_15, %c0_16] : memref<16x32xf32, #tpu.memory_space<vmem>>, vector<16x32xf32>
    tpu.vector_store %arg4[%c0_15, %c0_16], %29 {strides = array<i32>} : memref<16x32xf32, #tpu.memory_space<vmem>>, vector<16x32xf32>,
    return
  }
  func.func @transform_0(%arg0: i32) -> (i32, i32) {
    %c0_i32 = arith.constant 0 : i32
    %c0_i32_0 = arith.constant 0 : i32
    return %c0_i32, %arg0 : i32, i32
  }
  func.func @transform_1(%arg0: i32) -> (i32, i32) {
    %c0_i32 = arith.constant 0 : i32
    %c0_i32_0 = arith.constant 0 : i32
    return %c0_i32, %arg0 : i32, i32
  }
  func.func @transform_2(%arg0: i32) -> (i32, i32) {
    %c0_i32 = arith.constant 0 : i32
    %c0_i32_0 = arith.constant 0 : i32
    return %c0_i32, %arg0 : i32, i32
  }
  func.func @transform_3(%arg0: i32) -> (i32, i32) {
    %c0_i32 = arith.constant 0 : i32
    %c0_i32_0 = arith.constant 0 : i32
    return %c0_i32, %arg0 : i32, i32
  }
}

</mosaic_0001>

<llo_original>
// kernel: batch_norm_overtime.1
$region0: #{batch_norm_overtime.1}
  #allocation0 [shape = 'u32[]', space=smem, size = 0x4, offset = 0x4, fixed_abs, tag = 'smem constant byte address 0x4 - core index']
  #allocation1 [shape = 'u32[72,128]{1,0:T(1,128)}', space=vmem, size = 0x9000, scoped, tag = 'internal scratch']
  %s0 = inlined_call_operand.hbm [shape: f32[16,32], index: 0, kind: input, shape index: {}]
  %s1 = inlined_call_operand.vmem [shape: f32[1,32], index: 1, kind: input, shape index: {}]
  %s2 = inlined_call_operand.vmem [shape: f32[1,32], index: 2, kind: input, shape index: {}]
  %s3 = inlined_call_operand.hbm [shape: f32[16,32], index: 3, kind: output, shape index: {}]
  %s4 = sld [smem:[#allocation0]]
  $region26: #{batch_norm_overtime.1} parent=0
    _
  %s6 = ssub.s32 1, %s4
  %s7 = scalar_select 0, %s6, %s4
  $region1: #{batch_norm_overtime.1} parent=0
    #allocation2 [shape = 'u8[8192]{0}', space=vmem, size = 0x2000, scoped, tag = 'input window, operand 0, single buffered']
    #allocation3 [shape = 's32[1]{0}', space=sflag, size = 0x4, scoped, tag = 'scoped memory for batch_norm_overtime.1']
    #allocation4 [shape = 's32[1]{0}', space=sflag, size = 0x4, scoped, tag = 'scoped memory for batch_norm_overtime.1']
    #allocation5 [shape = 'u8[8192]{0}', space=vmem, size = 0x2000, scoped, tag = 'output window, operand 0, single buffered']
    %8 = vsyncpa [#allocation3], 0
    %9 = vsyncpa [#allocation4], 0
    // Predicated region
    $region2: #{batch_norm_overtime.1} parent=1 // pred_check
      _
    $region3: #{batch_norm_overtime.1} parent=1 // pred_check_branch
      %11 = sbr.rel (0) target = $region5
    $region4: #{batch_norm_overtime.1} parent=1 // pred_region
      %13 = vsyncadd [#allocation3], 0
      %s14 = sshll.u32 %s0, 4
      %s15 = int_to_ptr.hbm [resolvable:$true] %s14
      %s16 = sshll.u32 [#allocation2], 4
      %s17 = int_to_ptr.vmem [resolvable:$true] %s16
      %22 = dma.hbm_to_vmem [thread:$0]  %s15, 256, %s17, [#allocation3], 128, 128, 8
    $region5: #{batch_norm_overtime.1} parent=1 // pred_fallthru
      _
    // Predicated region
    $region6: #{batch_norm_overtime.1} parent=1 // pred_check
      _
    $region7: #{batch_norm_overtime.1} parent=1 // pred_check_branch
      %24 = sbr.rel (0) target = $region9
    $region8: #{batch_norm_overtime.1} parent=1 // pred_region
      _
    $region9: #{batch_norm_overtime.1} parent=1 // pred_fallthru
      _
    // Predicated region
    $region10: #{batch_norm_overtime.1} parent=1 // pred_check
      _
    $region11: #{batch_norm_overtime.1} parent=1 // pred_check_branch
      %26 = sbr.rel (0) target = $region13
    $region12: #{batch_norm_overtime.1} parent=1 // pred_region
      _
    $region13: #{batch_norm_overtime.1} parent=1 // pred_fallthru
      _
    // Predicated region
    $region14: #{batch_norm_overtime.1} parent=1 // pred_check
      _
    $region15: #{batch_norm_overtime.1} parent=1 // pred_check_branch
      %28 = sbr.rel (0) target = $region17
    $region16: #{batch_norm_overtime.1} parent=1 // pred_region
      %30 = dma.done [#allocation3], 256
    $region17: #{batch_norm_overtime.1} parent=1 // pred_fallthru
      _
    %v31 = vld [vmem:[#allocation2] sm:$0xff]
    %v32 = vld [vmem:[#allocation2 + $0x8] sm:$0xff]
    %vm33 = vcmask 261120
    %v34 = vsel %vm33, %v31, 0.0
    %v35 = vsel %vm33, %v32, 0.0
    %v36 = vadd.f32 %v34, %v35
    %v37 = vrot.slane %v36, 4
    %v38 = vadd.f32 %v36, %v37
    %v39 = vrot.slane %v38, 2
    %v40 = vadd.f32 %v38, %v39
    %v41 = vrot.slane %v40, 1
    %v42 = vadd.f32 %v40, %v41
    %v43 = vadd.f32 %v42, 0.0
    %v44 = vmul.f32 %v43, 0.0625
    %v45 = vsub.f32 %v31, %v44
    %v46 = vsub.f32 %v32, %v44
    %v47 = vmul.f32 %v45, %v45
    %v48 = vmul.f32 %v46, %v46
    %v49 = vsel %vm33, %v47, 0.0
    %v50 = vsel %vm33, %v48, 0.0
    %v51 = vadd.f32 %v49, %v50
    %v52 = vrot.slane %v51, 4
    %v53 = vadd.f32 %v51, %v52
    %v54 = vrot.slane %v53, 2
    %v55 = vadd.f32 %v53, %v54
    %v56 = vrot.slane %v55, 1
    %v57 = vadd.f32 %v55, %v56
    %v58 = vadd.f32 %v57, 0.0
    %v59 = vmul.f32 %v58, 0.0625
    %v60 = vadd.f32 %v59, 1e-05
    %v61 = vrsqrt.pop %v60
    %v62 = vmul.f32 %v61, %v60
    %v63 = vmul.f32 %v62, %v61
    %v64 = vmul.f32 0.5, %v63
    %v65 = vsub.f32 1.5, %v64
    %v66 = vmul.f32 %v61, %v65
    %vm67 = vweird.f32 %v60
    %vm68 = vweird.f32 %v61
    %vm69 = vmor %vm67, %vm68
    %v70 = vsel %vm69, %v61, %v66
    %v71 = vld [vmem:[%s1] sm:$0x1]
    %v72 = vmul.f32 %v70, %v71
    %v73 = vld [vmem:[%s2] sm:$0x1]
    %v74 = vmul.f32 %v44, %v72
    %v75 = vsub.f32 %v73, %v74
    %v76 = vperm.slane %v72, 0
    %v77 = vmul.f32 %v31, %v76
    %v78 = vmul.f32 %v32, %v76
    %v80 = vperm.slane %v75, 0
    %v82 = vadd.f32 %v77, %v80
    %v83 = vadd.f32 %v78, %v80
    %84 = vst.msk [vmem:[#allocation5] sm:$0xff] %vm33, %v82
    %85 = vst.msk [vmem:[#allocation5 + $0x8] sm:$0xff] %vm33, %v83
    // Predicated region
    $region18: #{batch_norm_overtime.1} parent=1 // pred_check
      _
    $region19: #{batch_norm_overtime.1} parent=1 // pred_check_branch
      %87 = sbr.rel (0) target = $region21
    $region20: #{batch_norm_overtime.1} parent=1 // pred_region
      %89 = vsyncadd [#allocation4], 0
      %s90 = sshll.u32 [#allocation5], 4
      %s91 = int_to_ptr.vmem [resolvable:$true] %s90
      %s92 = sshll.u32 %s3, 4
      %s93 = int_to_ptr.hbm [resolvable:$true] %s92
      %98 = dma.vmem_to_hbm [thread:$0]  %s91, 256, %s93, [#allocation4], 128, 128, 8
    $region21: #{batch_norm_overtime.1} parent=1 // pred_fallthru
      _
    // Predicated region
    $region22: #{batch_norm_overtime.1} parent=1 // pred_check
      _
    $region23: #{batch_norm_overtime.1} parent=1 // pred_check_branch
      %100 = sbr.rel (0) target = $region25
    $region24: #{batch_norm_overtime.1} parent=1 // pred_region
      %102 = dma.done [#allocation4], 256
    $region25: #{batch_norm_overtime.1} parent=1 // pred_fallthru
      _
    %103 = vsyncpa [#allocation3], 1
    %104 = vsyncpa [#allocation4], 1

</llo_original>
